<compile_context>
chip_gen: v7x
topology: tpu7x:2x2x1
jax: 0.10.0
libtpu: 0.0.40
codegen_flags: <defaults>
</compile_context>

<pallas_src>
import jax
import jax.numpy as jnp
from jax.experimental import pallas as pl
from jax.experimental.pallas import tpu as pltpu

EPS = 1e-5
MAX_BLOCK_BYTES = 8 * 1024 * 1024   # per-x-block cap (HBM roofline plateau)
MIN_GRID_STEPS = 4                  # keep both v7x TensorCores busy


def _vmem_limit_bytes():
    """3/4 of physical VMEM: 96 MiB on v5e/v6e (128 MiB), 48 MiB on v7x (64 MiB)."""
    cap = 64 * 1024 * 1024
    try:
        info = pltpu.get_tpu_info()
        c = getattr(info, "vmem_capacity_bytes", None)
        if c:
            cap = int(c)
    except Exception:
        pass
    return (cap * 3) // 4


# ----------------------------------------------------------------------------
# Fused path: each grid step owns P full (n, c) planes.
# ----------------------------------------------------------------------------
def _fused_kernel(w0_ref, ab_ref, x_ref, o_ref):
    # w0_ref : SMEM (1, 1)    scalar w0
    # ab_ref : VMEM (P, 2)    per-row [w1*gamma, w1*beta]
    # x_ref  : VMEM (P, HW)   P full planes, flattened spatially
    # o_ref  : VMEM (P, HW)
    x = x_ref[...].astype(jnp.float32)                        # (P, HW)

    # Instance-norm stats per row (biased variance, f32, two-pass).
    mean = jnp.mean(x, axis=-1, keepdims=True)                 # (P, 1)
    var = jnp.mean((x - mean) ** 2, axis=-1, keepdims=True)    # (P, 1)
    inv = jax.lax.rsqrt(var + EPS)                             # (P, 1)

    # out = w0*x + w1*(gamma*(x-mean)*inv + beta)
    #     = (w0 + a*inv) * x + (b - a*inv*mean),   a = w1*gamma, b = w1*beta
    ab = ab_ref[...]                                           # (P, 2)
    a_inv = ab[:, 0:1] * inv                                   # (P, 1)
    scale = w0_ref[0, 0] + a_inv                               # (P, 1)
    offset = ab[:, 1:2] - a_inv * mean                         # (P, 1)

    o_ref[...] = (x * scale + offset).astype(o_ref.dtype)


def adaptive_norm(x, w0, w1, gamma, beta, *, vmem_budget_bytes=None):
    """x: (N, C, H, W). w0, w1: scalars. gamma, beta: (C,).

    vmem_budget_bytes: optional override of the tiling budget (testing only).
    """
    N, C, H, W = x.shape
    HW = H * W
    rows = N * C

    # Free reshape for contiguous NCHW: (N, C, H, W) -> (N*C, H*W).
    x2 = x.reshape(rows, HW)

    w0f = jnp.asarray(w0, jnp.float32).reshape(())
    w1f = jnp.asarray(w1, jnp.float32).reshape(())
    gam = jnp.asarray(gamma, jnp.float32).reshape(C)
    bet = jnp.asarray(beta, jnp.float32).reshape(C)
    # Per-row folded affine, row = n*C + c.
    a_row = jnp.tile(w1f * gam, N)                             # (rows,)
    b_row = jnp.tile(w1f * bet, N)                             # (rows,)

    dbytes = jnp.dtype(x.dtype).itemsize
    sub = {1: 32, 2: 16, 4: 8}.get(dbytes, 8)                  # sublane multiple

    vmem_limit = _vmem_limit_bytes()
    budget = (vmem_budget_bytes if vmem_budget_bytes is not None
              else vmem_limit - (4 << 20))                     # headroom

    # VMEM per block-row: x & out double-buffered, ~2 f32 temps (also covers
    # the bf16->f32 upcast), plus the lane-padded (P, 2)->(P, 128) ab block x2.
    per_row = 4 * HW * dbytes + 2 * HW * 4 + 2 * 128 * 4

    if per_row * sub <= budget:
        # ---------------- fused single-kernel path ----------------
        max_rows_budget = budget // per_row
        max_rows_block = max(1, MAX_BLOCK_BYTES // (HW * dbytes))
        # Keep >= MIN_GRID_STEPS grid steps when rows allow (v7x megacore).
        p_steps = pl.cdiv(pl.cdiv(rows, MIN_GRID_STEPS), sub) * sub
        P = min(max_rows_budget, max_rows_block, p_steps)
        P = max(sub, (P // sub) * sub)
        grid_rows = pl.cdiv(rows, P)

        ab = jnp.stack([a_row, b_row], axis=-1)                # (rows, 2) f32
        w0_arr = w0f.reshape(1, 1)

        out = pl.pallas_call(
            _fused_kernel,
            out_shape=jax.ShapeDtypeStruct((rows, HW), x.dtype),
            grid=(grid_rows,),
            in_specs=[
                pl.BlockSpec(memory_space=pltpu.MemorySpace.SMEM),   # w0
                pl.BlockSpec((P, 2), lambda i: (i, 0)),              # [a, b]
                pl.BlockSpec((P, HW), lambda i: (i, 0)),             # x planes
            ],
            out_specs=pl.BlockSpec((P, HW), lambda i: (i, 0)),
            compiler_params=pltpu.CompilerParams(
                dimension_semantics=("parallel",),
                vmem_limit_bytes=int(vmem_limit)),
            cost_estimate=pl.CostEstimate(
                flops=6 * rows * HW,
                transcendentals=rows,
                bytes_accessed=2 * rows * HW * dbytes + rows * 8),
        )(w0_arr, ab, x2)
        return out.reshape(N, C, H, W)

    # ---------------- split path for very large H*W planes ----------------
    # Pass 1: per-row (sum, sumsq) over column chunks (hw axis = reduction).
    # Pass 2: tiny JAX postprocess to per-row scale/offset, then an
    #         elementwise apply kernel over the same chunking.
    P = sub
    per_col = 4 * P * dbytes + 2 * P * 4
    T = budget // per_col
    T = min(T, max(1, MAX_BLOCK_BYTES // (P * dbytes)))
    T = max(128, (T // 128) * 128)                             # lane multiple
    grid_rows = pl.cdiv(rows, P)
    grid_hw = pl.cdiv(HW, T)
    needs_mask = (HW % T) != 0

    def stats_kernel(x_ref, s_ref):
        # x_ref: (P, T) chunk;  s_ref: (P, 2) accumulator [sum, sumsq] (f32).
        j = pl.program_id(1)

        @pl.when(j == 0)
        def _():
            s_ref[...] = jnp.zeros_like(s_ref)

        xf = x_ref[...].astype(jnp.float32)
        if needs_mask:
            col = jax.lax.broadcasted_iota(jnp.int32, xf.shape, 1) + j * T
            xf = jnp.where(col < HW, xf, 0.0)
        ps = jnp.sum(xf, axis=-1, keepdims=True)               # (P, 1)
        pss = jnp.sum(xf * xf, axis=-1, keepdims=True)         # (P, 1)
        s_ref[...] += jnp.concatenate([ps, pss], axis=-1)      # (P, 2)

    stats = pl.pallas_call(
        stats_kernel,
        out_shape=jax.ShapeDtypeStruct((rows, 2), jnp.float32),
        grid=(grid_rows, grid_hw),
        in_specs=[pl.BlockSpec((P, T), lambda i, j: (i, j))],
        out_specs=pl.BlockSpec((P, 2), lambda i, j: (i, 0)),
        compiler_params=pltpu.CompilerParams(
            dimension_semantics=("parallel", "arbitrary"),
            vmem_limit_bytes=int(vmem_limit)),
        cost_estimate=pl.CostEstimate(
            flops=3 * rows * HW,
            transcendentals=0,
            bytes_accessed=rows * HW * dbytes + rows * 8),
    )(x2)

    mean = stats[:, 0] / HW                                    # zero-padded /
    var = jnp.maximum(stats[:, 1] / HW - mean * mean, 0.0)     # masked => exact
    inv = jax.lax.rsqrt(var + EPS)
    a_inv = a_row * inv
    scale = w0f + a_inv
    offset = b_row - a_inv * mean
    so = jnp.stack([scale, offset], axis=-1)                   # (rows, 2) f32

    def apply_kernel(so_ref, x_ref, o_ref):
        so_blk = so_ref[...]                                   # (P, 2)
        xf = x_ref[...].astype(jnp.float32)                    # (P, T)
        o_ref[...] = (xf * so_blk[:, 0:1] + so_blk[:, 1:2]).astype(o_ref.dtype)

    out = pl.pallas_call(
        apply_kernel,
        out_shape=jax.ShapeDtypeStruct((rows, HW), x.dtype),
        grid=(grid_rows, grid_hw),
        in_specs=[pl.BlockSpec((P, 2), lambda i, j: (i, 0)),
                  pl.BlockSpec((P, T), lambda i, j: (i, j))],
        out_specs=pl.BlockSpec((P, T), lambda i, j: (i, j)),
        compiler_params=pltpu.CompilerParams(
            dimension_semantics=("parallel", "parallel"),
            vmem_limit_bytes=int(vmem_limit)),
        cost_estimate=pl.CostEstimate(
            flops=2 * rows * HW,
            transcendentals=0,
            bytes_accessed=2 * rows * HW * dbytes + rows * 8),
    )(so, x2)
    return out.reshape(N, C, H, W)


def adaptive_norm_ref(x, w0, w1, gamma, beta):
    """Pure-JAX reference matching torch semantics."""
    xf = x.astype(jnp.float32)
    mean = jnp.mean(xf, axis=(2, 3), keepdims=True)
    var = jnp.mean((xf - mean) ** 2, axis=(2, 3), keepdims=True)
    xhat = (xf - mean) * jax.lax.rsqrt(var + EPS)
    inorm = gamma.reshape(1, -1, 1, 1) * xhat + beta.reshape(1, -1, 1, 1)
    return (w0 * xf + w1 * inorm).astype(x.dtype)


if __name__ == "__main__":
    key = jax.random.PRNGKey(0)
    N, C, H, W = 2, 4, 16, 16                     # nf = C = 4
    x = jax.random.normal(key, (N, C, H, W), dtype=jnp.float32)

    # Deterministic parameter init, exactly as the module's __init__:
    #   w0 = 1.0, w1 = 0.0, InstanceNorm2d affine: gamma = ones, beta = zeros.
    w0 = jnp.float32(1.0)
    w1 = jnp.float32(0.0)
    gamma = jnp.ones((C,), jnp.float32)
    beta = jnp.zeros((C,), jnp.float32)

    out = jax.block_until_ready(adaptive_norm(x, w0, w1, gamma, beta))
    ref = adaptive_norm_ref(x, w0, w1, gamma, beta)
    assert jnp.allclose(out, ref, atol=1e-5, rtol=1e-5)

    # Non-trivial parameters: exercises the instance-norm branch (fused path).
    k1, k2 = jax.random.split(key)
    w0b, w1b = jnp.float32(0.7), jnp.float32(0.3)
    gamma_b = jax.random.normal(k1, (C,), jnp.float32)
    beta_b = jax.random.normal(k2, (C,), jnp.float32)
    out_b = jax.block_until_ready(adaptive_norm(x, w0b, w1b, gamma_b, beta_b))
    ref_b = adaptive_norm_ref(x, w0b, w1b, gamma_b, beta_b)
    assert jnp.allclose(out_b, ref_b, atol=1e-5, rtol=1e-5)

    # Row-boundary case: rows = N*C = 3 < P (fused path, partial row block).
    x3 = jax.random.normal(k2, (1, 3, 16, 16), dtype=jnp.float32)
    g3 = jax.random.normal(k1, (3,), jnp.float32)
    b3 = jax.random.normal(k2, (3,), jnp.float32)
    out3 = jax.block_until_ready(adaptive_norm(x3, w0b, w1b, g3, b3))
    ref3 = adaptive_norm_ref(x3, w0b, w1b, g3, b3)
    assert jnp.allclose(out3, ref3, atol=1e-5, rtol=1e-5)

    # Large-H*W split path, forced with a tiny budget: HW=144 is not a
    # multiple of the 128-lane chunk (exercises column masking) and rows=3
    # exercises the row-boundary blocks in both split kernels.
    x4 = jax.random.normal(k1, (1, 3, 12, 12), dtype=jnp.float32)
    out4 = jax.block_until_ready(
        adaptive_norm(x4, w0b, w1b, g3, b3, vmem_budget_bytes=16 * 1024))
    ref4 = adaptive_norm_ref(x4, w0b, w1b, g3, b3)
    assert jnp.allclose(out4, ref4, atol=1e-4, rtol=1e-4)

    print("KERNEL_OK")
</pallas_src>

<mosaic_0001>
module attributes {stable_mosaic.version = 11 : i64} {
  func.func @_fused_kernel(%arg0: i32, %arg1: memref<1x1xf32, #tpu.memory_space<smem>>, %arg2: memref<8x2xf32, #tpu.memory_space<vmem>>, %arg3: memref<8x256xf32, #tpu.memory_space<vmem>>, %arg4: memref<8x256xf32, #tpu.memory_space<vmem>>) attributes {dimension_semantics = [#tpu.dimension_semantics<parallel>], iteration_bounds = array<i64: 1>, scalar_prefetch = 0 : i64, scratch_operands = 0 : i64, tpu.core_type = #tpu.core_type<tc>, window_params = [{transform_indices = @transform_0, window_bounds = array<i64: 1, 1>}, {transform_indices = @transform_1, window_bounds = array<i64: 8, 2>}, {transform_indices = @transform_2, window_bounds = array<i64: 8, 256>}, {transform_indices = @transform_3, window_bounds = array<i64: 8, 256>}]} {
    %c0 = arith.constant 0 : index
    %c0_0 = arith.constant 0 : index
    %0 = vector.load %arg3[%c0, %c0_0] : memref<8x256xf32, #tpu.memory_space<vmem>>, vector<8x256xf32>
    %cst = arith.constant dense<0.000000e+00> : vector<8xf32>
    %1 = vector.multi_reduction <add>, %0, %cst [1] : vector<8x256xf32> to vector<8xf32>
    %2 = vector.shape_cast %1 : vector<8xf32> to vector<8x1xf32>
    %cst_1 = arith.constant 2.560000e+02 : f32
    %3 = vector.broadcast %cst_1 : f32 to vector<8x1xf32>
    %4 = arith.divf %2, %3 : vector<8x1xf32>
    %5 = vector.broadcast %4 : vector<8x1xf32> to vector<8x256xf32>
    %6 = arith.subf %0, %5 : vector<8x256xf32>
    %7 = arith.mulf %6, %6 : vector<8x256xf32>
    %cst_2 = arith.constant dense<0.000000e+00> : vector<8xf32>
    %8 = vector.multi_reduction <add>, %7, %cst_2 [1] : vector<8x256xf32> to vector<8xf32>
    %9 = vector.shape_cast %8 : vector<8xf32> to vector<8x1xf32>
    %cst_3 = arith.constant 2.560000e+02 : f32
    %10 = vector.broadcast %cst_3 : f32 to vector<8x1xf32>
    %11 = arith.divf %9, %10 : vector<8x1xf32>
    %cst_4 = arith.constant 9.99999974E-6 : f32
    %12 = vector.broadcast %cst_4 : f32 to vector<8x1xf32>
    %13 = arith.addf %11, %12 : vector<8x1xf32>
    %14 = math.rsqrt %13 : vector<8x1xf32>
    %c0_5 = arith.constant 0 : index
    %c0_6 = arith.constant 0 : index
    %15 = vector.load %arg2[%c0_5, %c0_6] : memref<8x2xf32, #tpu.memory_space<vmem>>, vector<8x2xf32>
    %16 = vector.extract_strided_slice %15 {offsets = [0, 0], sizes = [8, 1], strides = [1, 1]} : vector<8x2xf32> to vector<8x1xf32>
    %17 = arith.mulf %16, %14 : vector<8x1xf32>
    %c0_7 = arith.constant 0 : index
    %c0_8 = arith.constant 0 : index
    %18 = memref.load %arg1[%c0_7, %c0_8] : memref<1x1xf32, #tpu.memory_space<smem>>
    %19 = vector.broadcast %18 : f32 to vector<8x1xf32>
    %20 = arith.addf %19, %17 : vector<8x1xf32>
    %21 = vector.extract_strided_slice %15 {offsets = [0, 1], sizes = [8, 1], strides = [1, 1]} : vector<8x2xf32> to vector<8x1xf32>
    %22 = arith.mulf %17, %4 : vector<8x1xf32>
    %23 = arith.subf %21, %22 : vector<8x1xf32>
    %24 = vector.broadcast %20 : vector<8x1xf32> to vector<8x256xf32>
    %25 = arith.mulf %0, %24 : vector<8x256xf32>
    %26 = vector.broadcast %23 : vector<8x1xf32> to vector<8x256xf32>
    %27 = arith.addf %25, %26 : vector<8x256xf32>
    %c0_9 = arith.constant 0 : index
    %c0_10 = arith.constant 0 : index
    %28 = vector.load %arg4[%c0_9, %c0_10] : memref<8x256xf32, #tpu.memory_space<vmem>>, vector<8x256xf32>
    tpu.vector_store %arg4[%c0_9, %c0_10], %27 {strides = array<i32>} : memref<8x256xf32, #tpu.memory_space<vmem>>, vector<8x256xf32>,
    return
  }
  func.func @transform_0(%arg0: i32) -> (i32, i32) {
    %c0_i32 = arith.constant 0 : i32
    %c0_i32_0 = arith.constant 0 : i32
    %c0_i32_1 = arith.constant 0 : i32
    return %c0_i32, %c0_i32_0 : i32, i32
  }
  func.func @transform_1(%arg0: i32) -> (i32, i32) {
    %c0_i32 = arith.constant 0 : i32
    %c0_i32_0 = arith.constant 0 : i32
    return %arg0, %c0_i32 : i32, i32
  }
  func.func @transform_2(%arg0: i32) -> (i32, i32) {
    %c0_i32 = arith.constant 0 : i32
    %c0_i32_0 = arith.constant 0 : i32
    return %arg0, %c0_i32 : i32, i32
  }
  func.func @transform_3(%arg0: i32) -> (i32, i32) {
    %c0_i32 = arith.constant 0 : i32
    %c0_i32_0 = arith.constant 0 : i32
    return %arg0, %c0_i32 : i32, i32
  }
}

</mosaic_0001>

<llo_original>
// kernel: tpu_custom_call.1
$region0: #{tpu_custom_call.1}
  #allocation0 [shape = 'u32[]', space=smem, size = 0x4, offset = 0x4, fixed_abs, tag = 'smem constant byte address 0x4 - core index']
  #allocation1 [shape = 'u32[144,128]{1,0:T(1,128)}', space=vmem, size = 0x12000, scoped, tag = 'internal scratch']
  #allocation2 [shape = 'f32[1,1]{1,0:T(1,128)S(6)}', space=smem, size = 0x200, scoped, tag = 'scoped memory for tpu_custom_call.1']
  %s0 = inlined_call_operand.<no memory space> [shape: f32[1,1], index: 0, kind: input, shape index: {}]
  %s1 = inlined_call_operand.vmem [shape: f32[8,2], index: 1, kind: input, shape index: {}]
  %s2 = inlined_call_operand.vmem [shape: f32[8,256], index: 2, kind: input, shape index: {}]
  %s3 = inlined_call_operand.hbm [shape: f32[8,256], index: 3, kind: output, shape index: {}]
  %s4 = sld [smem:[#allocation0]]
  $region22: #{tpu_custom_call.1} parent=0
    _
  %s6 = ssub.s32 1, %s4
  %s7 = scalar_select 0, %s6, %s4
  %8 = sst [smem:[#allocation2]] %s0
  $region1: #{tpu_custom_call.1} parent=0
    #allocation3 [shape = 'u8[8192]{0}', space=vmem, size = 0x2000, scoped, tag = 'output window, operand 0, single buffered']
    #allocation4 [shape = 's32[1]{0}', space=sflag, size = 0x4, scoped, tag = 'scoped memory for tpu_custom_call.1']
    %9 = vsyncpa [#allocation4], 0
    // Predicated region
    $region2: #{tpu_custom_call.1} parent=1 // pred_check
      _
    $region3: #{tpu_custom_call.1} parent=1 // pred_check_branch
      %11 = sbr.rel (0) target = $region5
    $region4: #{tpu_custom_call.1} parent=1 // pred_region
      _
    $region5: #{tpu_custom_call.1} parent=1 // pred_fallthru
      _
    // Predicated region
    $region6: #{tpu_custom_call.1} parent=1 // pred_check
      _
    $region7: #{tpu_custom_call.1} parent=1 // pred_check_branch
      %13 = sbr.rel (0) target = $region9
    $region8: #{tpu_custom_call.1} parent=1 // pred_region
      _
    $region9: #{tpu_custom_call.1} parent=1 // pred_fallthru
      _
    // Predicated region
    $region10: #{tpu_custom_call.1} parent=1 // pred_check
      _
    $region11: #{tpu_custom_call.1} parent=1 // pred_check_branch
      %15 = sbr.rel (0) target = $region13
    $region12: #{tpu_custom_call.1} parent=1 // pred_region
      _
    $region13: #{tpu_custom_call.1} parent=1 // pred_fallthru
      _
    %v16 = vld [vmem:[%s2] sm:$0xff]
    %v17 = vld [vmem:[%s2 + $0x8] sm:$0xff]
    %v18 = vadd.f32 %v16, %v17
    %19 = vadd.xlane.f32.xlu0 %v18
    %v20 = vpop.xlane.xlu0 %19
    %v21 = vrcp.pop 256.0
    %v22 = vmul.f32 %v20, %v21
    %v23 = vsub.f32 %v16, %v22
    %v24 = vsub.f32 %v17, %v22
    %v25 = vmul.f32 %v23, %v23
    %v26 = vmul.f32 %v24, %v24
    %v27 = vadd.f32 %v25, %v26
    %28 = vadd.xlane.f32.xlu0 %v27
    %v29 = vpop.xlane.xlu0 %28
    %v30 = vmul.f32 %v29, %v21
    %v31 = vadd.f32 %v30, 1e-05
    %v32 = vrsqrt.pop %v31
    %v33 = vld [vmem:[%s1] sm:$0xff]
    %v34 = vmul.f32 %v33, %v32
    %s35 = sld [smem:[#allocation2]]
    %v36 = vstv %s35
    %v37 = vadd.f32 %v36, %v34
    %v38 = vmul.f32 %v34, %v22
    %40 = vrot.lane.b32.xlu0 %v38, 1
    %v41 = vpop.permute.xlu0 %40
    %v43 = vsub.f32 %v33, %v41
    %45 = vset.pattern.permute.xlu0 0
    %46 = vperm.xlu0 %45, %v37
    %v47 = vpop.permute.xlu0 %46
    %v49 = vmul.f32 %v16, %v47
    %v50 = vmul.f32 %v17, %v47
    %52 = vset.pattern.permute.xlu0 1
    %53 = vperm.xlu0 %52, %v43
    %v54 = vpop.permute.xlu0 %53
    %v56 = vadd.f32 %v49, %v54
    %v57 = vadd.f32 %v50, %v54
    %58 = vst [vmem:[#allocation3] sm:$0xff] %v56
    %59 = vst [vmem:[#allocation3 + $0x8] sm:$0xff] %v57
    // Predicated region
    $region14: #{tpu_custom_call.1} parent=1 // pred_check
      _
    $region15: #{tpu_custom_call.1} parent=1 // pred_check_branch
      %61 = sbr.rel (0) target = $region17
    $region16: #{tpu_custom_call.1} parent=1 // pred_region
      %s63 = ssub.s32 256, 256
      %64 = vsyncadd [#allocation4], %s63
      %s66 = sshll.u32 [#allocation3], 4
      %s67 = int_to_ptr.vmem [resolvable:$true] %s66
      %69 = dma.vmem_to_hbm [thread:$0]  %s67, 256, %s3, [#allocation4]
    $region17: #{tpu_custom_call.1} parent=1 // pred_fallthru
      _
    // Predicated region
    $region18: #{tpu_custom_call.1} parent=1 // pred_check
      _
    $region19: #{tpu_custom_call.1} parent=1 // pred_check_branch
      %71 = sbr.rel (0) target = $region21
    $region20: #{tpu_custom_call.1} parent=1 // pred_region
      %72 = dma.done [#allocation4], 256
    $region21: #{tpu_custom_call.1} parent=1 // pred_fallthru
      _
    %73 = vsyncpa [#allocation4], 1

</llo_original>
